<compile_context>
chip_gen: v6e
topology: v6e:2x2x1
jax: 0.10.0
libtpu: 0.0.40
codegen_flags: <defaults>
</compile_context>

<pallas_src>
import functools

import jax
import jax.numpy as jnp
from jax.experimental import pallas as pl
from jax.experimental.pallas import tpu as pltpu


def _round_up(x, m):
    return (x + m - 1) // m * m


def rnn_forward_kernel(emb_ref, wih_ref, whh_ref, b_ref, wcls_ref, bcls_ref,
                       out_ref, pre_ref, *, T):
    """Recurrent hot path + classifier + sigmoid, all operands resident in VMEM.

    emb_ref : (T*Bp, Ep) bf16  time-major embedded inputs (zero/pad-id padded)
    wih_ref : (Ep, Hp)   bf16  = W_ih^T
    whh_ref : (Hp, Hp)   bf16  = W_hh^T
    b_ref   : (1, Hp)    f32   = b_ih + b_hh
    wcls_ref: (Hp, Op)   bf16  = W_cls^T
    bcls_ref: (1, Op)    f32
    out_ref : (Bp, Op)   f32
    pre_ref : (T*Bp, Hp) f32   VMEM scratch for the hoisted input projection
    """
    Bp = out_ref.shape[0]
    Hp = whh_ref.shape[0]

    # ---- Input projection for ALL time steps in one MXU call (bf16 in, f32 acc),
    #      materialized into VMEM scratch so the unrolled loop is fed from vld. ----
    pre_ref[...] = (
        jnp.dot(emb_ref[...], wih_ref[...], preferred_element_type=jnp.float32)
        + b_ref[...]                       # combined bias added exactly once
    )

    # ---- Loop-invariant read: only W_hh is held across the recurrence (bf16,
    #      8 vregs at Hp=128).  Classifier weights are read in the epilogue. ----
    whh = whh_ref[...]

    # ---- Serial recurrence: one small matmul + tanh per step, fully unrolled
    #      (T is a compile-time constant).  h carried in f32. ----
    h = jnp.zeros((Bp, Hp), dtype=jnp.float32)
    for t in range(T):
        pre_t = pre_ref[t * Bp:(t + 1) * Bp, :]          # static, sublane-aligned slice
        h = jnp.tanh(
            jnp.dot(h.astype(jnp.bfloat16), whh,
                    preferred_element_type=jnp.float32) + pre_t
        )

    # ---- Classifier + sigmoid (exp on EUP); weights read here, not earlier ----
    logits = (
        jnp.dot(h.astype(jnp.bfloat16), wcls_ref[...],
                preferred_element_type=jnp.float32)
        + bcls_ref[...]
    )
    out_ref[...] = jax.nn.sigmoid(logits)


def prepare_padded_params(params):
    """One-time padding / transposition / bf16 cast of weights (out of hot path).

    Hardware-aligned dims: lane (128) for E/H/O.  Zero padding keeps padded
    channels inert through tanh (tanh(0)=0) and they are sliced off at the end.
    """
    emb_table = params["emb"]          # (V, E), row 0 zeroed (padding_idx=0)
    w_ih = params["w_ih"]              # (H, E)
    w_hh = params["w_hh"]              # (H, H)
    b_ih = params["b_ih"]              # (H,)
    b_hh = params["b_hh"]              # (H,)
    w_cls = params["w_cls"]            # (O, H)
    b_cls = params["b_cls"]            # (O,)

    E = emb_table.shape[1]
    H = w_hh.shape[0]
    O = w_cls.shape[0]
    Ep, Hp, Op = _round_up(E, 128), _round_up(H, 128), _round_up(O, 128)

    f32, bf16 = jnp.float32, jnp.bfloat16

    emb_pad = jnp.zeros((emb_table.shape[0], Ep), f32).at[:, :E].set(emb_table)
    wih_t = jnp.zeros((Ep, Hp), f32).at[:E, :H].set(w_ih.T)
    whh_t = jnp.zeros((Hp, Hp), f32).at[:H, :H].set(w_hh.T)
    bias = jnp.zeros((1, Hp), f32).at[0, :H].set(b_ih + b_hh)
    wcls_t = jnp.zeros((Hp, Op), f32).at[:H, :O].set(w_cls.T)
    bcls_p = jnp.zeros((1, Op), f32).at[0, :O].set(b_cls)

    return {
        "emb": emb_pad.astype(bf16),       # bf16 table -> bf16 gather, half the DMA
        "wih_t": wih_t.astype(bf16),
        "whh_t": whh_t.astype(bf16),
        "bias": bias,                      # f32 (VPU adds stay f32)
        "wcls_t": wcls_t.astype(bf16),
        "bcls": bcls_p,                    # f32
        "out_dim": O,
    }


def rnn_model_forward(x, padded):
    """Full RNNModel forward. x: (B, T) int32 token ids. Returns (B, out_dim) f32."""
    B, T = x.shape
    Bp = _round_up(B, 8)                   # sublane alignment for the batch dim
    Ep, Hp = padded["wih_t"].shape
    Op = padded["wcls_t"].shape[1]
    O = padded["out_dim"]

    # --- Glue: pad token ids (id 0 = padding row) instead of padding activations,
    #     then a single time-major gather.  Padded batch rows are sliced off. ---
    ids_tm = x.T                                            # (T, B)
    if Bp != B:
        ids_tm = jnp.pad(ids_tm, ((0, 0), (0, Bp - B)))     # pad with id 0
    emb_tm = jnp.take(padded["emb"], ids_tm.reshape(T * Bp), axis=0)  # (T*Bp, Ep) bf16

    vmem = pl.BlockSpec(memory_space=pltpu.MemorySpace.VMEM)
    kernel = functools.partial(rnn_forward_kernel, T=T)

    out_padded = pl.pallas_call(
        kernel,
        out_shape=jax.ShapeDtypeStruct((Bp, Op), jnp.float32),
        in_specs=[vmem] * 6,
        out_specs=vmem,
        scratch_shapes=[pltpu.VMEM((T * Bp, Hp), jnp.float32)],
    )(emb_tm, padded["wih_t"], padded["whh_t"], padded["bias"],
      padded["wcls_t"], padded["bcls"])

    return out_padded[:B, :O]


def init_params(key, vocab_size, emb_dim, hidden_dim, out_dim):
    """Deterministic parameter init mirroring the PyTorch module's shapes."""
    k_emb, k_wih, k_whh, k_bih, k_bhh, k_wc, k_bc = jax.random.split(key, 7)

    emb = jax.random.normal(k_emb, (vocab_size, emb_dim), dtype=jnp.float32)
    emb = emb.at[0].set(0.0)  # padding_idx=0

    k_rnn = 1.0 / jnp.sqrt(hidden_dim)
    w_ih = jax.random.uniform(k_wih, (hidden_dim, emb_dim), jnp.float32, -k_rnn, k_rnn)
    w_hh = jax.random.uniform(k_whh, (hidden_dim, hidden_dim), jnp.float32, -k_rnn, k_rnn)
    b_ih = jax.random.uniform(k_bih, (hidden_dim,), jnp.float32, -k_rnn, k_rnn)
    b_hh = jax.random.uniform(k_bhh, (hidden_dim,), jnp.float32, -k_rnn, k_rnn)

    k_lin = 1.0 / jnp.sqrt(hidden_dim)
    w_cls = jax.random.uniform(k_wc, (out_dim, hidden_dim), jnp.float32, -k_lin, k_lin)
    b_cls = jax.random.uniform(k_bc, (out_dim,), jnp.float32, -k_lin, k_lin)

    return {
        "emb": emb, "w_ih": w_ih, "w_hh": w_hh, "b_ih": b_ih, "b_hh": b_hh,
        "w_cls": w_cls, "b_cls": b_cls,
    }


def rnn_model_reference(x, params):
    """Pure-JAX f32 reference (mirrors the PyTorch forward) for correctness check."""
    emb = jnp.take(params["emb"], x, axis=0)                   # (B, T, E)
    B, T, _ = emb.shape
    H = params["w_hh"].shape[0]
    h = jnp.zeros((B, H), jnp.float32)
    for t in range(T):
        h = jnp.tanh(
            emb[:, t, :] @ params["w_ih"].T + h @ params["w_hh"].T
            + params["b_ih"] + params["b_hh"]
        )
    logits = h @ params["w_cls"].T + params["b_cls"]
    return jax.nn.sigmoid(logits)


if __name__ == "__main__":
    # cfg(vs=50, emb=16, hidden=32) ; out_dim=2 ; batch=2 ; seq=8
    VOCAB, EMB, HIDDEN, OUT_DIM = 50, 16, 32, 2
    BATCH, SEQ = 2, 8

    key = jax.random.PRNGKey(0)
    k_params, k_x = jax.random.split(key)

    params = init_params(k_params, VOCAB, EMB, HIDDEN, OUT_DIM)
    x = jax.random.randint(k_x, (BATCH, SEQ), minval=0, maxval=VOCAB, dtype=jnp.int32)

    padded = prepare_padded_params(params)   # one-time weight prep, out of hot path
    out = rnn_model_forward(x, padded)
    out = jax.block_until_ready(out)

    assert out.shape == (BATCH, OUT_DIM)
    assert bool(jnp.all((out >= 0.0) & (out <= 1.0)))

    ref = rnn_model_reference(x, params)
    assert bool(jnp.all(jnp.abs(out - ref) < 1e-2)), "mismatch vs reference"

    print("KERNEL_OK")
</pallas_src>

<mosaic_0001>
module attributes {stable_mosaic.version = 11 : i64} {
  func.func @rnn_forward_kernel(%arg0: memref<64x128xbf16, #tpu.memory_space<vmem>>, %arg1: memref<128x128xbf16, #tpu.memory_space<vmem>>, %arg2: memref<128x128xbf16, #tpu.memory_space<vmem>>, %arg3: memref<1x128xf32, #tpu.memory_space<vmem>>, %arg4: memref<128x128xbf16, #tpu.memory_space<vmem>>, %arg5: memref<1x128xf32, #tpu.memory_space<vmem>>, %arg6: memref<8x128xf32, #tpu.memory_space<vmem>>, %arg7: memref<64x128xf32, #tpu.memory_space<vmem>>) attributes {dimension_semantics = [], scalar_prefetch = 0 : i64, scratch_operands = 1 : i64, tpu.core_type = #tpu.core_type<tc>} {
    %c0 = arith.constant 0 : index
    %c0_0 = arith.constant 0 : index
    %0 = vector.load %arg0[%c0, %c0_0] : memref<64x128xbf16, #tpu.memory_space<vmem>>, vector<64x128xbf16>
    %c0_1 = arith.constant 0 : index
    %c0_2 = arith.constant 0 : index
    %1 = vector.load %arg1[%c0_1, %c0_2] : memref<128x128xbf16, #tpu.memory_space<vmem>>, vector<128x128xbf16>
    %cst = arith.constant dense<0.000000e+00> : vector<64x128xf32>
    %2 = tpu.matmul %0, %1, %cst {dimension_numbers = #tpu.dot_dimension_numbers<[1], [0], [0], [1], [0, 0, 1, 1], [], []>} : vector<64x128xbf16>, vector<128x128xbf16>, vector<64x128xf32> -> vector<64x128xf32>
    %c0_3 = arith.constant 0 : index
    %c0_4 = arith.constant 0 : index
    %3 = vector.load %arg3[%c0_3, %c0_4] : memref<1x128xf32, #tpu.memory_space<vmem>>, vector<1x128xf32>
    %4 = vector.broadcast %3 : vector<1x128xf32> to vector<64x128xf32>
    %5 = arith.addf %2, %4 : vector<64x128xf32>
    %c0_5 = arith.constant 0 : index
    %c0_6 = arith.constant 0 : index
    %6 = vector.load %arg7[%c0_5, %c0_6] : memref<64x128xf32, #tpu.memory_space<vmem>>, vector<64x128xf32>
    tpu.vector_store %arg7[%c0_5, %c0_6], %5 {strides = array<i32>} : memref<64x128xf32, #tpu.memory_space<vmem>>, vector<64x128xf32>,
    %c0_7 = arith.constant 0 : index
    %c0_8 = arith.constant 0 : index
    %7 = vector.load %arg2[%c0_7, %c0_8] : memref<128x128xbf16, #tpu.memory_space<vmem>>, vector<128x128xbf16>
    %cst_9 = arith.constant 0.000000e+00 : f32
    %8 = vector.broadcast %cst_9 : f32 to vector<8x128xf32>
    %c0_10 = arith.constant 0 : index
    %c0_11 = arith.constant 0 : index
    %9 = vector.load %arg7[%c0_10, %c0_11] : memref<64x128xf32, #tpu.memory_space<vmem>>, vector<8x128xf32>
    %10 = arith.truncf %8 : vector<8x128xf32> to vector<8x128xbf16>
    %cst_12 = arith.constant dense<0.000000e+00> : vector<8x128xf32>
    %11 = tpu.matmul %10, %7, %cst_12 {dimension_numbers = #tpu.dot_dimension_numbers<[1], [0], [0], [1], [0, 0, 1, 1], [], []>} : vector<8x128xbf16>, vector<128x128xbf16>, vector<8x128xf32> -> vector<8x128xf32>
    %12 = arith.addf %11, %9 : vector<8x128xf32>
    %13 = math.tanh %12 : vector<8x128xf32>
    %c8 = arith.constant 8 : index
    %c0_13 = arith.constant 0 : index
    %14 = vector.load %arg7[%c8, %c0_13] : memref<64x128xf32, #tpu.memory_space<vmem>>, vector<8x128xf32>
    %15 = arith.truncf %13 : vector<8x128xf32> to vector<8x128xbf16>
    %cst_14 = arith.constant dense<0.000000e+00> : vector<8x128xf32>
    %16 = tpu.matmul %15, %7, %cst_14 {dimension_numbers = #tpu.dot_dimension_numbers<[1], [0], [0], [1], [0, 0, 1, 1], [], []>} : vector<8x128xbf16>, vector<128x128xbf16>, vector<8x128xf32> -> vector<8x128xf32>
    %17 = arith.addf %16, %14 : vector<8x128xf32>
    %18 = math.tanh %17 : vector<8x128xf32>
    %c16 = arith.constant 16 : index
    %c0_15 = arith.constant 0 : index
    %19 = vector.load %arg7[%c16, %c0_15] : memref<64x128xf32, #tpu.memory_space<vmem>>, vector<8x128xf32>
    %20 = arith.truncf %18 : vector<8x128xf32> to vector<8x128xbf16>
    %cst_16 = arith.constant dense<0.000000e+00> : vector<8x128xf32>
    %21 = tpu.matmul %20, %7, %cst_16 {dimension_numbers = #tpu.dot_dimension_numbers<[1], [0], [0], [1], [0, 0, 1, 1], [], []>} : vector<8x128xbf16>, vector<128x128xbf16>, vector<8x128xf32> -> vector<8x128xf32>
    %22 = arith.addf %21, %19 : vector<8x128xf32>
    %23 = math.tanh %22 : vector<8x128xf32>
    %c24 = arith.constant 24 : index
    %c0_17 = arith.constant 0 : index
    %24 = vector.load %arg7[%c24, %c0_17] : memref<64x128xf32, #tpu.memory_space<vmem>>, vector<8x128xf32>
    %25 = arith.truncf %23 : vector<8x128xf32> to vector<8x128xbf16>
    %cst_18 = arith.constant dense<0.000000e+00> : vector<8x128xf32>
    %26 = tpu.matmul %25, %7, %cst_18 {dimension_numbers = #tpu.dot_dimension_numbers<[1], [0], [0], [1], [0, 0, 1, 1], [], []>} : vector<8x128xbf16>, vector<128x128xbf16>, vector<8x128xf32> -> vector<8x128xf32>
    %27 = arith.addf %26, %24 : vector<8x128xf32>
    %28 = math.tanh %27 : vector<8x128xf32>
    %c32 = arith.constant 32 : index
    %c0_19 = arith.constant 0 : index
    %29 = vector.load %arg7[%c32, %c0_19] : memref<64x128xf32, #tpu.memory_space<vmem>>, vector<8x128xf32>
    %30 = arith.truncf %28 : vector<8x128xf32> to vector<8x128xbf16>
    %cst_20 = arith.constant dense<0.000000e+00> : vector<8x128xf32>
    %31 = tpu.matmul %30, %7, %cst_20 {dimension_numbers = #tpu.dot_dimension_numbers<[1], [0], [0], [1], [0, 0, 1, 1], [], []>} : vector<8x128xbf16>, vector<128x128xbf16>, vector<8x128xf32> -> vector<8x128xf32>
    %32 = arith.addf %31, %29 : vector<8x128xf32>
    %33 = math.tanh %32 : vector<8x128xf32>
    %c40 = arith.constant 40 : index
    %c0_21 = arith.constant 0 : index
    %34 = vector.load %arg7[%c40, %c0_21] : memref<64x128xf32, #tpu.memory_space<vmem>>, vector<8x128xf32>
    %35 = arith.truncf %33 : vector<8x128xf32> to vector<8x128xbf16>
    %cst_22 = arith.constant dense<0.000000e+00> : vector<8x128xf32>
    %36 = tpu.matmul %35, %7, %cst_22 {dimension_numbers = #tpu.dot_dimension_numbers<[1], [0], [0], [1], [0, 0, 1, 1], [], []>} : vector<8x128xbf16>, vector<128x128xbf16>, vector<8x128xf32> -> vector<8x128xf32>
    %37 = arith.addf %36, %34 : vector<8x128xf32>
    %38 = math.tanh %37 : vector<8x128xf32>
    %c48 = arith.constant 48 : index
    %c0_23 = arith.constant 0 : index
    %39 = vector.load %arg7[%c48, %c0_23] : memref<64x128xf32, #tpu.memory_space<vmem>>, vector<8x128xf32>
    %40 = arith.truncf %38 : vector<8x128xf32> to vector<8x128xbf16>
    %cst_24 = arith.constant dense<0.000000e+00> : vector<8x128xf32>
    %41 = tpu.matmul %40, %7, %cst_24 {dimension_numbers = #tpu.dot_dimension_numbers<[1], [0], [0], [1], [0, 0, 1, 1], [], []>} : vector<8x128xbf16>, vector<128x128xbf16>, vector<8x128xf32> -> vector<8x128xf32>
    %42 = arith.addf %41, %39 : vector<8x128xf32>
    %43 = math.tanh %42 : vector<8x128xf32>
    %c56 = arith.constant 56 : index
    %c0_25 = arith.constant 0 : index
    %44 = vector.load %arg7[%c56, %c0_25] : memref<64x128xf32, #tpu.memory_space<vmem>>, vector<8x128xf32>
    %45 = arith.truncf %43 : vector<8x128xf32> to vector<8x128xbf16>
    %cst_26 = arith.constant dense<0.000000e+00> : vector<8x128xf32>
    %46 = tpu.matmul %45, %7, %cst_26 {dimension_numbers = #tpu.dot_dimension_numbers<[1], [0], [0], [1], [0, 0, 1, 1], [], []>} : vector<8x128xbf16>, vector<128x128xbf16>, vector<8x128xf32> -> vector<8x128xf32>
    %47 = arith.addf %46, %44 : vector<8x128xf32>
    %48 = math.tanh %47 : vector<8x128xf32>
    %49 = arith.truncf %48 : vector<8x128xf32> to vector<8x128xbf16>
    %c0_27 = arith.constant 0 : index
    %c0_28 = arith.constant 0 : index
    %50 = vector.load %arg4[%c0_27, %c0_28] : memref<128x128xbf16, #tpu.memory_space<vmem>>, vector<128x128xbf16>
    %cst_29 = arith.constant dense<0.000000e+00> : vector<8x128xf32>
    %51 = tpu.matmul %49, %50, %cst_29 {dimension_numbers = #tpu.dot_dimension_numbers<[1], [0], [0], [1], [0, 0, 1, 1], [], []>} : vector<8x128xbf16>, vector<128x128xbf16>, vector<8x128xf32> -> vector<8x128xf32>
    %c0_30 = arith.constant 0 : index
    %c0_31 = arith.constant 0 : index
    %52 = vector.load %arg5[%c0_30, %c0_31] : memref<1x128xf32, #tpu.memory_space<vmem>>, vector<1x128xf32>
    %53 = vector.broadcast %52 : vector<1x128xf32> to vector<8x128xf32>
    %54 = arith.addf %51, %53 : vector<8x128xf32>
    %55 = arith.negf %54 : vector<8x128xf32>
    %56 = math.exp %55 : vector<8x128xf32>
    %cst_32 = arith.constant 1.000000e+00 : f32
    %57 = vector.broadcast %cst_32 : f32 to vector<8x128xf32>
    %58 = arith.addf %57, %56 : vector<8x128xf32>
    %59 = arith.divf %57, %58 : vector<8x128xf32>
    %c0_33 = arith.constant 0 : index
    %c0_34 = arith.constant 0 : index
    %60 = vector.load %arg6[%c0_33, %c0_34] : memref<8x128xf32, #tpu.memory_space<vmem>>, vector<8x128xf32>
    tpu.vector_store %arg6[%c0_33, %c0_34], %59 {strides = array<i32>} : memref<8x128xf32, #tpu.memory_space<vmem>>, vector<8x128xf32>,
    return
  }
}

</mosaic_0001>

<llo_original>
// kernel: tpu_custom_call.1
$region0: #{tpu_custom_call.1}
  #allocation0 [shape = 'u32[]', space=smem, size = 0x4, offset = 0x4, fixed_abs, tag = 'smem constant byte address 0x4 - core index']
  #allocation1 [shape = 'u32[144,128]{1,0:T(1,128)}', space=vmem, size = 0x12000, scoped, tag = 'internal scratch']
  #allocation2 [shape = 'f32[64,128]{1,0:T(8,128)}', space=vmem, size = 0x8000, scoped, tag = 'scratch operand']
  %s0 = inlined_call_operand.hbm [shape: bf16[64,128], index: 0, kind: input, shape index: {}]
  %s1 = inlined_call_operand.hbm [shape: bf16[128,128], index: 1, kind: input, shape index: {}]
  %s2 = inlined_call_operand.hbm [shape: bf16[128,128], index: 2, kind: input, shape index: {}]
  %s3 = inlined_call_operand.vmem [shape: f32[1,128], index: 3, kind: input, shape index: {}]
  %s4 = inlined_call_operand.hbm [shape: bf16[128,128], index: 4, kind: input, shape index: {}]
  %s5 = inlined_call_operand.vmem [shape: f32[1,128], index: 5, kind: input, shape index: {}]
  %s6 = inlined_call_operand.hbm [shape: f32[8,128], index: 6, kind: output, shape index: {}]
  %s7 = sld [smem:[#allocation0]]
  $region50: #{tpu_custom_call.1} parent=0
    _
  %s9 = ssub.s32 1, %s7
  %s10 = scalar_select 0, %s9, %s7
  $region1: #{tpu_custom_call.1} parent=0
    #allocation3 [shape = 'u8[16384]{0}', space=vmem, size = 0x4000, scoped, tag = 'input window, operand 0, single buffered']
    #allocation4 [shape = 's32[1]{0}', space=sflag, size = 0x4, scoped, tag = 'scoped memory for tpu_custom_call.1']
    #allocation5 [shape = 's32[1]{0}', space=sflag, size = 0x4, scoped, tag = 'scoped memory for tpu_custom_call.1']
    #allocation6 [shape = 'u8[32768]{0}', space=vmem, size = 0x8000, scoped, tag = 'input window, operand 1, single buffered']
    #allocation7 [shape = 's32[1]{0}', space=sflag, size = 0x4, scoped, tag = 'scoped memory for tpu_custom_call.1']
    #allocation8 [shape = 'u8[32768]{0}', space=vmem, size = 0x8000, scoped, tag = 'input window, operand 2, single buffered']
    #allocation9 [shape = 'u8[32768]{0}', space=vmem, size = 0x8000, scoped, tag = 'input window, operand 4, single buffered']
    #allocation10 [shape = 's32[1]{0}', space=sflag, size = 0x4, scoped, tag = 'scoped memory for tpu_custom_call.1']
    #allocation11 [shape = 'u8[4096]{0}', space=vmem, size = 0x1000, scoped, tag = 'output window, operand 0, single buffered']
    %11 = vsyncpa [#allocation4], 0
    %12 = vsyncpa [#allocation7], 0
    %13 = vsyncpa [#allocation10], 0
    %14 = vsyncpa [#allocation5], 0
    // Predicated region
    $region2: #{tpu_custom_call.1} parent=1 // pred_check
      _
    $region3: #{tpu_custom_call.1} parent=1 // pred_check_branch
      %16 = sbr.rel (0) target = $region5
    $region4: #{tpu_custom_call.1} parent=1 // pred_region
      %s18 = ssub.s32 512, 512
      %19 = vsyncadd [#allocation4], %s18
      %s20 = sshll.u32 [#allocation3], 4
      %s21 = int_to_ptr.vmem [resolvable:$true] %s20
      %26 = dma.hbm_to_vmem [thread:$0]  %s0, 512, %s21, [#allocation4], 64, 64, 4
    $region5: #{tpu_custom_call.1} parent=1 // pred_fallthru
      _
    // Predicated region
    $region6: #{tpu_custom_call.1} parent=1 // pred_check
      _
    $region7: #{tpu_custom_call.1} parent=1 // pred_check_branch
      %28 = sbr.rel (0) target = $region9
    $region8: #{tpu_custom_call.1} parent=1 // pred_region
      %s30 = ssub.s32 1024, 1024
      %31 = vsyncadd [#allocation7], %s30
      %s32 = sshll.u32 [#allocation6], 4
      %s33 = int_to_ptr.vmem [resolvable:$true] %s32
      %38 = dma.hbm_to_vmem [thread:$0]  %s1, 1024, %s33, [#allocation7], 64, 64, 4
    $region9: #{tpu_custom_call.1} parent=1 // pred_fallthru
      _
    // Predicated region
    $region10: #{tpu_custom_call.1} parent=1 // pred_check
      _
    $region11: #{tpu_custom_call.1} parent=1 // pred_check_branch
      %40 = sbr.rel (0) target = $region13
    $region12: #{tpu_custom_call.1} parent=1 // pred_region
      %s42 = ssub.s32 1024, 1024
      %43 = vsyncadd [#allocation7], %s42
      %s44 = sshll.u32 [#allocation8], 4
      %s45 = int_to_ptr.vmem [resolvable:$true] %s44
      %50 = dma.hbm_to_vmem [thread:$0]  %s2, 1024, %s45, [#allocation7], 64, 64, 4
    $region13: #{tpu_custom_call.1} parent=1 // pred_fallthru
      _
    // Predicated region
    $region14: #{tpu_custom_call.1} parent=1 // pred_check
      _
    $region15: #{tpu_custom_call.1} parent=1 // pred_check_branch
      %52 = sbr.rel (0) target = $region17
    $region16: #{tpu_custom_call.1} parent=1 // pred_region
      _
    $region17: #{tpu_custom_call.1} parent=1 // pred_fallthru
      _
    // Predicated region
    $region18: #{tpu_custom_call.1} parent=1 // pred_check
      _
    $region19: #{tpu_custom_call.1} parent=1 // pred_check_branch
      %54 = sbr.rel (0) target = $region21
    $region20: #{tpu_custom_call.1} parent=1 // pred_region
      %s56 = ssub.s32 1024, 1024
      %57 = vsyncadd [#allocation10], %s56
      %s58 = sshll.u32 [#allocation9], 4
      %s59 = int_to_ptr.vmem [resolvable:$true] %s58
      %64 = dma.hbm_to_vmem [thread:$0]  %s4, 1024, %s59, [#allocation10], 64, 64, 4
    $region21: #{tpu_custom_call.1} parent=1 // pred_fallthru
      _
    // Predicated region
    $region22: #{tpu_custom_call.1} parent=1 // pred_check
      _
    $region23: #{tpu_custom_call.1} parent=1 // pred_check_branch
      %66 = sbr.rel (0) target = $region25
    $region24: #{tpu_custom_call.1} parent=1 // pred_region
      _
    $region25: #{tpu_custom_call.1} parent=1 // pred_fallthru
      _
    // Predicated region
    $region26: #{tpu_custom_call.1} parent=1 // pred_check
      _
    $region27: #{tpu_custom_call.1} parent=1 // pred_check_branch
      %68 = sbr.rel (0) target = $region29
    $region28: #{tpu_custom_call.1} parent=1 // pred_region
      %69 = dma.done [#allocation4], 512
    $region29: #{tpu_custom_call.1} parent=1 // pred_fallthru
      _
    // Predicated region
    $region30: #{tpu_custom_call.1} parent=1 // pred_check
      _
    $region31: #{tpu_custom_call.1} parent=1 // pred_check_branch
      %71 = sbr.rel (0) target = $region33
    $region32: #{tpu_custom_call.1} parent=1 // pred_region
      %72 = dma.done [#allocation7], 1024
    $region33: #{tpu_custom_call.1} parent=1 // pred_fallthru
      _
    // Predicated region
    $region34: #{tpu_custom_call.1} parent=1 // pred_check
      _
    $region35: #{tpu_custom_call.1} parent=1 // pred_check_branch
      %74 = sbr.rel (0) target = $region37
    $region36: #{tpu_custom_call.1} parent=1 // pred_region
      %75 = dma.done [#allocation7], 1024
    $region37: #{tpu_custom_call.1} parent=1 // pred_fallthru
      _
    // Predicated region
    $region38: #{tpu_custom_call.1} parent=1 // pred_check
      _
    $region39: #{tpu_custom_call.1} parent=1 // pred_check_branch
      %77 = sbr.rel (0) target = $region41
    $region40: #{tpu_custom_call.1} parent=1 // pred_region
      %78 = dma.done [#allocation10], 1024
    $region41: #{tpu_custom_call.1} parent=1 // pred_fallthru
      _
    %v80 = vld [vmem:[#allocation3] sm:$0xf]
    %v81 = vld [vmem:[#allocation3 + $0x4] sm:$0xf]
    %v82 = vld [vmem:[#allocation3 + $0x8] sm:$0xf]
    %v83 = vld [vmem:[#allocation3 + $0xc] sm:$0xf]
    %v84 = vld [vmem:[#allocation3 + $0x10] sm:$0xf]
    %v85 = vld [vmem:[#allocation3 + $0x14] sm:$0xf]
    %v86 = vld [vmem:[#allocation3 + $0x18] sm:$0xf]
    %v87 = vld [vmem:[#allocation3 + $0x1c] sm:$0xf]
    %v88 = vld [vmem:[#allocation6] sm:$0xf]
    %v89 = vld [vmem:[#allocation6 + $0x4] sm:$0xf]
    %v90 = vld [vmem:[#allocation6 + $0x8] sm:$0xf]
    %v91 = vld [vmem:[#allocation6 + $0xc] sm:$0xf]
    %v92 = vld [vmem:[#allocation6 + $0x10] sm:$0xf]
    %v93 = vld [vmem:[#allocation6 + $0x14] sm:$0xf]
    %v94 = vld [vmem:[#allocation6 + $0x18] sm:$0xf]
    %v95 = vld [vmem:[#allocation6 + $0x1c] sm:$0xf]
    %v96 = vld [vmem:[#allocation6 + $0x20] sm:$0xf]
    %v97 = vld [vmem:[#allocation6 + $0x24] sm:$0xf]
    %v98 = vld [vmem:[#allocation6 + $0x28] sm:$0xf]
    %v99 = vld [vmem:[#allocation6 + $0x2c] sm:$0xf]
    %v100 = vld [vmem:[#allocation6 + $0x30] sm:$0xf]
    %v101 = vld [vmem:[#allocation6 + $0x34] sm:$0xf]
    %v102 = vld [vmem:[#allocation6 + $0x38] sm:$0xf]
    %v103 = vld [vmem:[#allocation6 + $0x3c] sm:$0xf]
    %v104 = vld [vmem:[%s3] sm:$0x1]
    %v106 = vlaneseq
    %v107 = vshrl.u32 %v106, 7
    %v108 = vsub.s32 0, %v107
    %v109 = vrot.slane %v104, %v108
    %v119 = vunpack.c.l.b16 %v80
    %v120 = vunpack.c.l.b16 %v81
    %v121 = vunpack.c.l.b16 %v82
    %v122 = vunpack.c.l.b16 %v83
    %v123 = vunpack.c.l.b16 %v84
    %v124 = vunpack.c.l.b16 %v85
    %v125 = vunpack.c.l.b16 %v86
    %v126 = vunpack.c.l.b16 %v87
    %v127 = vpack.c.b16 %v120, %v119
    %v128 = vpack.c.b16 %v122, %v121
    %v129 = vpack.c.b16 %v124, %v123
    %v130 = vpack.c.b16 %v126, %v125
    %v151 = vunpack.c.l.b16 %v88
    %v152 = vunpack.c.l.b16 %v89
    %v153 = vunpack.c.l.b16 %v90
    %v154 = vunpack.c.l.b16 %v91
    %v155 = vunpack.c.l.b16 %v92
    %v156 = vunpack.c.l.b16 %v93
    %v157 = vunpack.c.l.b16 %v94
    %v158 = vunpack.c.l.b16 %v95
    %v159 = vunpack.c.l.b16 %v96
    %v160 = vunpack.c.l.b16 %v97
    %v161 = vunpack.c.l.b16 %v98
    %v162 = vunpack.c.l.b16 %v99
    %v163 = vunpack.c.l.b16 %v100
    %v164 = vunpack.c.l.b16 %v101
    %v165 = vunpack.c.l.b16 %v102
    %v166 = vunpack.c.l.b16 %v103
    %v167 = vpack.c.b16 %v152, %v151
    %v168 = vpack.c.b16 %v154, %v153
    %v169 = vpack.c.b16 %v156, %v155
    %v170 = vpack.c.b16 %v158, %v157
    %v171 = vpack.c.b16 %v160, %v159
    %v172 = vpack.c.b16 %v162, %v161
    %v173 = vpack.c.b16 %v164, %v163
    %v174 = vpack.c.b16 %v166, %v165
    %183 = vmatprep.subr.bf16.mxu0 0
    %184 = vmatpush1.bf16.msra.mxu0 %v174
    %185 = vmatprep.subr.bf16.mxu0 0
    %186 = vmatpush1.bf16.msra.mxu0 %v173
    %187 = vmatprep.subr.bf16.mxu0 0
    %188 = vmatpush1.bf16.msra.mxu0 %v172
    %189 = vmatprep.subr.bf16.mxu0 0
    %190 = vmatpush1.bf16.msra.mxu0 %v171
    %191 = vmatprep.subr.bf16.mxu0 0
    %192 = vmatpush1.bf16.msra.mxu0 %v170
    %193 = vmatprep.subr.bf16.mxu0 0
    %194 = vmatpush1.bf16.msra.mxu0 %v169
    %195 = vmatprep.subr.bf16.mxu0 0
    %196 = vmatpush1.bf16.msra.mxu0 %v168
    %197 = vmatprep.subr.bf16.mxu0 0
    %198 = vmatpush1.bf16.msra.mxu0 %v167
    %199 = vmatprep.subr.bf16.mxu0 0
    %200 = vmatpush2.bf16.msra.mxu0 0
    %201 = vmatprep.subr.bf16.mxu0 0
    %202 = vmatpush2.bf16.msra.mxu0 0
    %203 = vmatprep.subr.bf16.mxu0 0
    %204 = vmatpush2.bf16.msra.mxu0 0
    %205 = vmatprep.subr.bf16.mxu0 0
    %206 = vmatpush2.bf16.msra.mxu0 0
    %207 = vmatprep.subr.bf16.mxu0 0
    %208 = vmatpush2.bf16.msra.mxu0 0
    %209 = vmatprep.subr.bf16.mxu0 0
    %210 = vmatpush2.bf16.msra.mxu0 0
    %211 = vmatprep.subr.bf16.mxu0 0
    %212 = vmatpush2.bf16.msra.mxu0 0
    %213 = vmatprep.subr.bf16.mxu0 0
    %214 = vmatpush2.bf16.msra.mxu0 0
    %215 = vmatprep.mubr.bf16.mxu0 0
    %216 = vmatmul.mubr.bf16.gmra.mxu0 %v127
    %v217 = vpop.f32.mrf.mxu0
    %v218 = vadd.f32 %v109, %v217
    %v219 = vpop.f32.mrf.mxu0
    %v220 = vpop.f32.mrf.mxu0
    %v221 = vadd.f32 %v109, %v220
    %v222 = vpop.f32.mrf.mxu0
    %223 = vmatprep.mubr.bf16.mxu0 0
    %224 = vmatmul.mubr.bf16.gmra.mxu0 %v128
    %v225 = vpop.f32.mrf.mxu0
    %v226 = vadd.f32 %v109, %v225
    %v227 = vpop.f32.mrf.mxu0
    %v228 = vpop.f32.mrf.mxu0
    %v229 = vadd.f32 %v109, %v228
    %v230 = vpop.f32.mrf.mxu0
    %231 = vmatprep.mubr.bf16.mxu0 0
    %232 = vmatmul.mubr.bf16.gmra.mxu0 %v129
    %v233 = vpop.f32.mrf.mxu0
    %v234 = vadd.f32 %v109, %v233
    %v235 = vpop.f32.mrf.mxu0
    %v236 = vpop.f32.mrf.mxu0
    %v237 = vadd.f32 %v109, %v236
    %v238 = vpop.f32.mrf.mxu0
    %239 = vmatprep.mubr.bf16.mxu0 0
    %240 = vmatmul.mubr.bf16.gmra.mxu0 %v130
    %v241 = vpop.f32.mrf.mxu0
    %v242 = vadd.f32 %v109, %v241
    %v243 = vpop.f32.mrf.mxu0
    %v244 = vpop.f32.mrf.mxu0
    %v245 = vadd.f32 %v109, %v244
    %v246 = vpop.f32.mrf.mxu0
    %247 = vdwg.mxu0
    %248 = vst [vmem:[#allocation2] sm:$0xff] %v218
    %249 = vst [vmem:[#allocation2 + $0x8] sm:$0xff] %v221
    %250 = vst [vmem:[#allocation2 + $0x10] sm:$0xff] %v226
    %251 = vst [vmem:[#allocation2 + $0x18] sm:$0xff] %v229
    %252 = vst [vmem:[#allocation2 + $0x20] sm:$0xff] %v234
    %253 = vst [vmem:[#allocation2 + $0x28] sm:$0xff] %v237
    %254 = vst [vmem:[#allocation2 + $0x30] sm:$0xff] %v242
    %255 = vst [vmem:[#allocation2 + $0x38] sm:$0xff] %v245
    %v256 = vld [vmem:[#allocation8] sm:$0xf]
    %v257 = vld [vmem:[#allocation8 + $0x4] sm:$0xf]
    %v258 = vld [vmem:[#allocation8 + $0x8] sm:$0xf]
    %v259 = vld [vmem:[#allocation8 + $0xc] sm:$0xf]
    %v260 = vld [vmem:[#allocation8 + $0x10] sm:$0xf]
    %v261 = vld [vmem:[#allocation8 + $0x14] sm:$0xf]
    %v262 = vld [vmem:[#allocation8 + $0x18] sm:$0xf]
    %v263 = vld [vmem:[#allocation8 + $0x1c] sm:$0xf]
    %v264 = vld [vmem:[#allocation8 + $0x20] sm:$0xf]
    %v265 = vld [vmem:[#allocation8 + $0x24] sm:$0xf]
    %v266 = vld [vmem:[#allocation8 + $0x28] sm:$0xf]
    %v267 = vld [vmem:[#allocation8 + $0x2c] sm:$0xf]
    %v268 = vld [vmem:[#allocation8 + $0x30] sm:$0xf]
    %v269 = vld [vmem:[#allocation8 + $0x34] sm:$0xf]
    %v270 = vld [vmem:[#allocation8 + $0x38] sm:$0xf]
    %v271 = vld [vmem:[#allocation8 + $0x3c] sm:$0xf]
    %v272 = vld [vmem:[#allocation2] sm:$0xff]
    %v289 = vunpack.c.l.b16 %v256
    %v290 = vunpack.c.l.b16 %v257
    %v291 = vunpack.c.l.b16 %v258
    %v292 = vunpack.c.l.b16 %v259
    %v293 = vunpack.c.l.b16 %v260
    %v294 = vunpack.c.l.b16 %v261
    %v295 = vunpack.c.l.b16 %v262
    %v296 = vunpack.c.l.b16 %v263
    %v297 = vunpack.c.l.b16 %v264
    %v298 = vunpack.c.l.b16 %v265
    %v299 = vunpack.c.l.b16 %v266
    %v300 = vunpack.c.l.b16 %v267
    %v301 = vunpack.c.l.b16 %v268
    %v302 = vunpack.c.l.b16 %v269
    %v303 = vunpack.c.l.b16 %v270
    %v304 = vunpack.c.l.b16 %v271
    %v305 = vpack.c.b16 %v290, %v289
    %v306 = vpack.c.b16 %v292, %v291
    %v307 = vpack.c.b16 %v294, %v293
    %v308 = vpack.c.b16 %v296, %v295
    %v309 = vpack.c.b16 %v298, %v297
    %v310 = vpack.c.b16 %v300, %v299
    %v311 = vpack.c.b16 %v302, %v301
    %v312 = vpack.c.b16 %v304, %v303
    %321 = vmatprep.subr.bf16.mxu0 0
    %322 = vmatpush1.bf16.msra.mxu0 %v312
    %323 = vmatprep.subr.bf16.mxu0 0
    %324 = vmatpush1.bf16.msra.mxu0 %v311
    %325 = vmatprep.subr.bf16.mxu0 0
    %326 = vmatpush1.bf16.msra.mxu0 %v310
    %327 = vmatprep.subr.bf16.mxu0 0
    %328 = vmatpush1.bf16.msra.mxu0 %v309
    %329 = vmatprep.subr.bf16.mxu0 0
    %330 = vmatpush1.bf16.msra.mxu0 %v308
    %331 = vmatprep.subr.bf16.mxu0 0
    %332 = vmatpush1.bf16.msra.mxu0 %v307
    %333 = vmatprep.subr.bf16.mxu0 0
    %334 = vmatpush1.bf16.msra.mxu0 %v306
    %335 = vmatprep.subr.bf16.mxu0 0
    %336 = vmatpush1.bf16.msra.mxu0 %v305
    %337 = vmatprep.subr.bf16.mxu0 0
    %338 = vmatpush2.bf16.msra.mxu0 0
    %339 = vmatprep.subr.bf16.mxu0 0
    %340 = vmatpush2.bf16.msra.mxu0 0
    %341 = vmatprep.subr.bf16.mxu0 0
    %342 = vmatpush2.bf16.msra.mxu0 0
    %343 = vmatprep.subr.bf16.mxu0 0
    %344 = vmatpush2.bf16.msra.mxu0 0
    %345 = vmatprep.subr.bf16.mxu0 0
    %346 = vmatpush2.bf16.msra.mxu0 0
    %347 = vmatprep.subr.bf16.mxu0 0
    %348 = vmatpush2.bf16.msra.mxu0 0
    %349 = vmatprep.subr.bf16.mxu0 0
    %350 = vmatpush2.bf16.msra.mxu0 0
    %351 = vmatprep.subr.bf16.mxu0 0
    %352 = vmatpush2.bf16.msra.mxu0 0
    %353 = vmatprep.mubr.bf16.mxu0 0
    %354 = vmatmul.mubr.bf16.gmra.mxu0 0
    %v355 = vpop.f32.mrf.mxu0
    %v356 = vadd.f32 %v272, %v355
    %v357 = vpop.f32.mrf.mxu0
    %v358 = vpop.f32.mrf.mxu0
    %v359 = vpop.f32.mrf.mxu0
    %360 = vdwg.mxu0
    %v361 = vtanh.pop %v356
    %v362 = vld [vmem:[#allocation2 + $0x8] sm:$0xff]
    %v363 = vpack.c.bf16 %v361, %v361
    %364 = vmatprep.subr.bf16.mxu0 0
    %365 = vmatpush1.bf16.msra.mxu0 %v312
    %366 = vmatprep.subr.bf16.mxu0 0
    %367 = vmatpush1.bf16.msra.mxu0 %v311
    %368 = vmatprep.subr.bf16.mxu0 0
    %369 = vmatpush1.bf16.msra.mxu0 %v310
    %370 = vmatprep.subr.bf16.mxu0 0
    %371 = vmatpush1.bf16.msra.mxu0 %v309
    %372 = vmatprep.subr.bf16.mxu0 0
    %373 = vmatpush1.bf16.msra.mxu0 %v308
    %374 = vmatprep.subr.bf16.mxu0 0
    %375 = vmatpush1.bf16.msra.mxu0 %v307
    %376 = vmatprep.subr.bf16.mxu0 0
    %377 = vmatpush1.bf16.msra.mxu0 %v306
    %378 = vmatprep.subr.bf16.mxu0 0
    %379 = vmatpush1.bf16.msra.mxu0 %v305
    %380 = vmatprep.subr.bf16.mxu0 0
    %381 = vmatpush2.bf16.msra.mxu0 0
    %382 = vmatprep.subr.bf16.mxu0 0
    %383 = vmatpush2.bf16.msra.mxu0 0
    %384 = vmatprep.subr.bf16.mxu0 0
    %385 = vmatpush2.bf16.msra.mxu0 0
    %386 = vmatprep.subr.bf16.mxu0 0
    %387 = vmatpush2.bf16.msra.mxu0 0
    %388 = vmatprep.subr.bf16.mxu0 0
    %389 = vmatpush2.bf16.msra.mxu0 0
    %390 = vmatprep.subr.bf16.mxu0 0
    %391 = vmatpush2.bf16.msra.mxu0 0
    %392 = vmatprep.subr.bf16.mxu0 0
    %393 = vmatpush2.bf16.msra.mxu0 0
    %394 = vmatprep.subr.bf16.mxu0 0
    %395 = vmatpush2.bf16.msra.mxu0 0
    %396 = vmatprep.mubr.bf16.mxu0 0
    %397 = vmatmul.mubr.bf16.gmra.mxu0 %v363
    %v398 = vpop.f32.mrf.mxu0
    %v399 = vadd.f32 %v362, %v398
    %v400 = vpop.f32.mrf.mxu0
    %v401 = vpop.f32.mrf.mxu0
    %v402 = vpop.f32.mrf.mxu0
    %403 = vdwg.mxu0
    %v404 = vtanh.pop %v399
    %v405 = vld [vmem:[#allocation2 + $0x10] sm:$0xff]
    %v406 = vpack.c.bf16 %v404, %v404
    %407 = vmatprep.subr.bf16.mxu0 0
    %408 = vmatpush1.bf16.msra.mxu0 %v312
    %409 = vmatprep.subr.bf16.mxu0 0
    %410 = vmatpush1.bf16.msra.mxu0 %v311
    %411 = vmatprep.subr.bf16.mxu0 0
    %412 = vmatpush1.bf16.msra.mxu0 %v310
    %413 = vmatprep.subr.bf16.mxu0 0
    %414 = vmatpush1.bf16.msra.mxu0 %v309
    %415 = vmatprep.subr.bf16.mxu0 0
    %416 = vmatpush1.bf16.msra.mxu0 %v308
    %417 = vmatprep.subr.bf16.mxu0 0
    %418 = vmatpush1.bf16.msra.mxu0 %v307
    %419 = vmatprep.subr.bf16.mxu0 0
    %420 = vmatpush1.bf16.msra.mxu0 %v306
    %421 = vmatprep.subr.bf16.mxu0 0
    %422 = vmatpush1.bf16.msra.mxu0 %v305
    %423 = vmatprep.subr.bf16.mxu0 0
    %424 = vmatpush2.bf16.msra.mxu0 0
    %425 = vmatprep.subr.bf16.mxu0 0
    %426 = vmatpush2.bf16.msra.mxu0 0
    %427 = vmatprep.subr.bf16.mxu0 0
    %428 = vmatpush2.bf16.msra.mxu0 0
    %429 = vmatprep.subr.bf16.mxu0 0
    %430 = vmatpush2.bf16.msra.mxu0 0
    %431 = vmatprep.subr.bf16.mxu0 0
    %432 = vmatpush2.bf16.msra.mxu0 0
    %433 = vmatprep.subr.bf16.mxu0 0
    %434 = vmatpush2.bf16.msra.mxu0 0
    %435 = vmatprep.subr.bf16.mxu0 0
    %436 = vmatpush2.bf16.msra.mxu0 0
    %437 = vmatprep.subr.bf16.mxu0 0
    %438 = vmatpush2.bf16.msra.mxu0 0
    %439 = vmatprep.mubr.bf16.mxu0 0
    %440 = vmatmul.mubr.bf16.gmra.mxu0 %v406
    %v441 = vpop.f32.mrf.mxu0
    %v442 = vadd.f32 %v405, %v441
    %v443 = vpop.f32.mrf.mxu0
    %v444 = vpop.f32.mrf.mxu0
    %v445 = vpop.f32.mrf.mxu0
    %446 = vdwg.mxu0
    %v447 = vtanh.pop %v442
    %v448 = vld [vmem:[#allocation2 + $0x18] sm:$0xff]
    %v449 = vpack.c.bf16 %v447, %v447
    %450 = vmatprep.subr.bf16.mxu0 0
    %451 = vmatpush1.bf16.msra.mxu0 %v312
    %452 = vmatprep.subr.bf16.mxu0 0
    %453 = vmatpush1.bf16.msra.mxu0 %v311
    %454 = vmatprep.subr.bf16.mxu0 0
    %455 = vmatpush1.bf16.msra.mxu0 %v310
    %456 = vmatprep.subr.bf16.mxu0 0
    %457 = vmatpush1.bf16.msra.mxu0 %v309
    %458 = vmatprep.subr.bf16.mxu0 0
    %459 = vmatpush1.bf16.msra.mxu0 %v308
    %460 = vmatprep.subr.bf16.mxu0 0
    %461 = vmatpush1.bf16.msra.mxu0 %v307
    %462 = vmatprep.subr.bf16.mxu0 0
    %463 = vmatpush1.bf16.msra.mxu0 %v306
    %464 = vmatprep.subr.bf16.mxu0 0
    %465 = vmatpush1.bf16.msra.mxu0 %v305
    %466 = vmatprep.subr.bf16.mxu0 0
    %467 = vmatpush2.bf16.msra.mxu0 0
    %468 = vmatprep.subr.bf16.mxu0 0
    %469 = vmatpush2.bf16.msra.mxu0 0
    %470 = vmatprep.subr.bf16.mxu0 0
    %471 = vmatpush2.bf16.msra.mxu0 0
    %472 = vmatprep.subr.bf16.mxu0 0
    %473 = vmatpush2.bf16.msra.mxu0 0
    %474 = vmatprep.subr.bf16.mxu0 0
    %475 = vmatpush2.bf16.msra.mxu0 0
    %476 = vmatprep.subr.bf16.mxu0 0
    %477 = vmatpush2.bf16.msra.mxu0 0
    %478 = vmatprep.subr.bf16.mxu0 0
    %479 = vmatpush2.bf16.msra.mxu0 0
    %480 = vmatprep.subr.bf16.mxu0 0
    %481 = vmatpush2.bf16.msra.mxu0 0
    %482 = vmatprep.mubr.bf16.mxu0 0
    %483 = vmatmul.mubr.bf16.gmra.mxu0 %v449
    %v484 = vpop.f32.mrf.mxu0
    %v485 = vadd.f32 %v448, %v484
    %v486 = vpop.f32.mrf.mxu0
    %v487 = vpop.f32.mrf.mxu0
    %v488 = vpop.f32.mrf.mxu0
    %489 = vdwg.mxu0
    %v490 = vtanh.pop %v485
    %v491 = vld [vmem:[#allocation2 + $0x20] sm:$0xff]
    %v492 = vpack.c.bf16 %v490, %v490
    %493 = vmatprep.subr.bf16.mxu0 0
    %494 = vmatpush1.bf16.msra.mxu0 %v312
    %495 = vmatprep.subr.bf16.mxu0 0
    %496 = vmatpush1.bf16.msra.mxu0 %v311
    %497 = vmatprep.subr.bf16.mxu0 0
    %498 = vmatpush1.bf16.msra.mxu0 %v310
    %499 = vmatprep.subr.bf16.mxu0 0
    %500 = vmatpush1.bf16.msra.mxu0 %v309
    %501 = vmatprep.subr.bf16.mxu0 0
    %502 = vmatpush1.bf16.msra.mxu0 %v308
    %503 = vmatprep.subr.bf16.mxu0 0
    %504 = vmatpush1.bf16.msra.mxu0 %v307
    %505 = vmatprep.subr.bf16.mxu0 0
    %506 = vmatpush1.bf16.msra.mxu0 %v306
    %507 = vmatprep.subr.bf16.mxu0 0
    %508 = vmatpush1.bf16.msra.mxu0 %v305
    %509 = vmatprep.subr.bf16.mxu0 0
    %510 = vmatpush2.bf16.msra.mxu0 0
    %511 = vmatprep.subr.bf16.mxu0 0
    %512 = vmatpush2.bf16.msra.mxu0 0
    %513 = vmatprep.subr.bf16.mxu0 0
    %514 = vmatpush2.bf16.msra.mxu0 0
    %515 = vmatprep.subr.bf16.mxu0 0
    %516 = vmatpush2.bf16.msra.mxu0 0
    %517 = vmatprep.subr.bf16.mxu0 0
    %518 = vmatpush2.bf16.msra.mxu0 0
    %519 = vmatprep.subr.bf16.mxu0 0
    %520 = vmatpush2.bf16.msra.mxu0 0
    %521 = vmatprep.subr.bf16.mxu0 0
    %522 = vmatpush2.bf16.msra.mxu0 0
    %523 = vmatprep.subr.bf16.mxu0 0
    %524 = vmatpush2.bf16.msra.mxu0 0
    %525 = vmatprep.mubr.bf16.mxu0 0
    %526 = vmatmul.mubr.bf16.gmra.mxu0 %v492
    %v527 = vpop.f32.mrf.mxu0
    %v528 = vadd.f32 %v491, %v527
    %v529 = vpop.f32.mrf.mxu0
    %v530 = vpop.f32.mrf.mxu0
    %v531 = vpop.f32.mrf.mxu0
    %532 = vdwg.mxu0
    %v533 = vtanh.pop %v528
    %v534 = vld [vmem:[#allocation2 + $0x28] sm:$0xff]
    %v535 = vpack.c.bf16 %v533, %v533
    %536 = vmatprep.subr.bf16.mxu0 0
    %537 = vmatpush1.bf16.msra.mxu0 %v312
    %538 = vmatprep.subr.bf16.mxu0 0
    %539 = vmatpush1.bf16.msra.mxu0 %v311
    %540 = vmatprep.subr.bf16.mxu0 0
    %541 = vmatpush1.bf16.msra.mxu0 %v310
    %542 = vmatprep.subr.bf16.mxu0 0
    %543 = vmatpush1.bf16.msra.mxu0 %v309
    %544 = vmatprep.subr.bf16.mxu0 0
    %545 = vmatpush1.bf16.msra.mxu0 %v308
    %546 = vmatprep.subr.bf16.mxu0 0
    %547 = vmatpush1.bf16.msra.mxu0 %v307
    %548 = vmatprep.subr.bf16.mxu0 0
    %549 = vmatpush1.bf16.msra.mxu0 %v306
    %550 = vmatprep.subr.bf16.mxu0 0
    %551 = vmatpush1.bf16.msra.mxu0 %v305
    %552 = vmatprep.subr.bf16.mxu0 0
    %553 = vmatpush2.bf16.msra.mxu0 0
    %554 = vmatprep.subr.bf16.mxu0 0
    %555 = vmatpush2.bf16.msra.mxu0 0
    %556 = vmatprep.subr.bf16.mxu0 0
    %557 = vmatpush2.bf16.msra.mxu0 0
    %558 = vmatprep.subr.bf16.mxu0 0
    %559 = vmatpush2.bf16.msra.mxu0 0
    %560 = vmatprep.subr.bf16.mxu0 0
    %561 = vmatpush2.bf16.msra.mxu0 0
    %562 = vmatprep.subr.bf16.mxu0 0
    %563 = vmatpush2.bf16.msra.mxu0 0
    %564 = vmatprep.subr.bf16.mxu0 0
    %565 = vmatpush2.bf16.msra.mxu0 0
    %566 = vmatprep.subr.bf16.mxu0 0
    %567 = vmatpush2.bf16.msra.mxu0 0
    %568 = vmatprep.mubr.bf16.mxu0 0
    %569 = vmatmul.mubr.bf16.gmra.mxu0 %v535
    %v570 = vpop.f32.mrf.mxu0
    %v571 = vadd.f32 %v534, %v570
    %v572 = vpop.f32.mrf.mxu0
    %v573 = vpop.f32.mrf.mxu0
    %v574 = vpop.f32.mrf.mxu0
    %575 = vdwg.mxu0
    %v576 = vtanh.pop %v571
    %v577 = vld [vmem:[#allocation2 + $0x30] sm:$0xff]
    %v578 = vpack.c.bf16 %v576, %v576
    %579 = vmatprep.subr.bf16.mxu0 0
    %580 = vmatpush1.bf16.msra.mxu0 %v312
    %581 = vmatprep.subr.bf16.mxu0 0
    %582 = vmatpush1.bf16.msra.mxu0 %v311
    %583 = vmatprep.subr.bf16.mxu0 0
    %584 = vmatpush1.bf16.msra.mxu0 %v310
    %585 = vmatprep.subr.bf16.mxu0 0
    %586 = vmatpush1.bf16.msra.mxu0 %v309
    %587 = vmatprep.subr.bf16.mxu0 0
    %588 = vmatpush1.bf16.msra.mxu0 %v308
    %589 = vmatprep.subr.bf16.mxu0 0
    %590 = vmatpush1.bf16.msra.mxu0 %v307
    %591 = vmatprep.subr.bf16.mxu0 0
    %592 = vmatpush1.bf16.msra.mxu0 %v306
    %593 = vmatprep.subr.bf16.mxu0 0
    %594 = vmatpush1.bf16.msra.mxu0 %v305
    %595 = vmatprep.subr.bf16.mxu0 0
    %596 = vmatpush2.bf16.msra.mxu0 0
    %597 = vmatprep.subr.bf16.mxu0 0
    %598 = vmatpush2.bf16.msra.mxu0 0
    %599 = vmatprep.subr.bf16.mxu0 0
    %600 = vmatpush2.bf16.msra.mxu0 0
    %601 = vmatprep.subr.bf16.mxu0 0
    %602 = vmatpush2.bf16.msra.mxu0 0
    %603 = vmatprep.subr.bf16.mxu0 0
    %604 = vmatpush2.bf16.msra.mxu0 0
    %605 = vmatprep.subr.bf16.mxu0 0
    %606 = vmatpush2.bf16.msra.mxu0 0
    %607 = vmatprep.subr.bf16.mxu0 0
    %608 = vmatpush2.bf16.msra.mxu0 0
    %609 = vmatprep.subr.bf16.mxu0 0
    %610 = vmatpush2.bf16.msra.mxu0 0
    %611 = vmatprep.mubr.bf16.mxu0 0
    %612 = vmatmul.mubr.bf16.gmra.mxu0 %v578
    %v613 = vpop.f32.mrf.mxu0
    %v614 = vadd.f32 %v577, %v613
    %v615 = vpop.f32.mrf.mxu0
    %v616 = vpop.f32.mrf.mxu0
    %v617 = vpop.f32.mrf.mxu0
    %618 = vdwg.mxu0
    %v619 = vtanh.pop %v614
    %v620 = vld [vmem:[#allocation2 + $0x38] sm:$0xff]
    %v621 = vpack.c.bf16 %v619, %v619
    %622 = vmatprep.subr.bf16.mxu0 0
    %623 = vmatpush1.bf16.msra.mxu0 %v312
    %624 = vmatprep.subr.bf16.mxu0 0
    %625 = vmatpush1.bf16.msra.mxu0 %v311
    %626 = vmatprep.subr.bf16.mxu0 0
    %627 = vmatpush1.bf16.msra.mxu0 %v310
    %628 = vmatprep.subr.bf16.mxu0 0
    %629 = vmatpush1.bf16.msra.mxu0 %v309
    %630 = vmatprep.subr.bf16.mxu0 0
    %631 = vmatpush1.bf16.msra.mxu0 %v308
    %632 = vmatprep.subr.bf16.mxu0 0
    %633 = vmatpush1.bf16.msra.mxu0 %v307
    %634 = vmatprep.subr.bf16.mxu0 0
    %635 = vmatpush1.bf16.msra.mxu0 %v306
    %636 = vmatprep.subr.bf16.mxu0 0
    %637 = vmatpush1.bf16.msra.mxu0 %v305
    %638 = vmatprep.subr.bf16.mxu0 0
    %639 = vmatpush2.bf16.msra.mxu0 0
    %640 = vmatprep.subr.bf16.mxu0 0
    %641 = vmatpush2.bf16.msra.mxu0 0
    %642 = vmatprep.subr.bf16.mxu0 0
    %643 = vmatpush2.bf16.msra.mxu0 0
    %644 = vmatprep.subr.bf16.mxu0 0
    %645 = vmatpush2.bf16.msra.mxu0 0
    %646 = vmatprep.subr.bf16.mxu0 0
    %647 = vmatpush2.bf16.msra.mxu0 0
    %648 = vmatprep.subr.bf16.mxu0 0
    %649 = vmatpush2.bf16.msra.mxu0 0
    %650 = vmatprep.subr.bf16.mxu0 0
    %651 = vmatpush2.bf16.msra.mxu0 0
    %652 = vmatprep.subr.bf16.mxu0 0
    %653 = vmatpush2.bf16.msra.mxu0 0
    %654 = vmatprep.mubr.bf16.mxu0 0
    %655 = vmatmul.mubr.bf16.gmra.mxu0 %v621
    %v656 = vpop.f32.mrf.mxu0
    %v657 = vadd.f32 %v620, %v656
    %v658 = vpop.f32.mrf.mxu0
    %v659 = vpop.f32.mrf.mxu0
    %v660 = vpop.f32.mrf.mxu0
    %661 = vdwg.mxu0
    %v662 = vtanh.pop %v657
    %v663 = vpack.c.bf16 %v662, %v662
    %v664 = vld [vmem:[#allocation9] sm:$0xf]
    %v665 = vld [vmem:[#allocation9 + $0x4] sm:$0xf]
    %v666 = vld [vmem:[#allocation9 + $0x8] sm:$0xf]
    %v667 = vld [vmem:[#allocation9 + $0xc] sm:$0xf]
    %v668 = vld [vmem:[#allocation9 + $0x10] sm:$0xf]
    %v669 = vld [vmem:[#allocation9 + $0x14] sm:$0xf]
    %v670 = vld [vmem:[#allocation9 + $0x18] sm:$0xf]
    %v671 = vld [vmem:[#allocation9 + $0x1c] sm:$0xf]
    %v672 = vld [vmem:[#allocation9 + $0x20] sm:$0xf]
    %v673 = vld [vmem:[#allocation9 + $0x24] sm:$0xf]
    %v674 = vld [vmem:[#allocation9 + $0x28] sm:$0xf]
    %v675 = vld [vmem:[#allocation9 + $0x2c] sm:$0xf]
    %v676 = vld [vmem:[#allocation9 + $0x30] sm:$0xf]
    %v677 = vld [vmem:[#allocation9 + $0x34] sm:$0xf]
    %v678 = vld [vmem:[#allocation9 + $0x38] sm:$0xf]
    %v679 = vld [vmem:[#allocation9 + $0x3c] sm:$0xf]
    %v680 = vld [vmem:[%s5] sm:$0x1]
    %v682 = vlaneseq
    %v683 = vshrl.u32 %v682, 7
    %v684 = vsub.s32 0, %v683
    %v685 = vrot.slane %v680, %v684
    %v703 = vunpack.c.l.b16 %v664
    %v704 = vunpack.c.l.b16 %v665
    %v705 = vunpack.c.l.b16 %v666
    %v706 = vunpack.c.l.b16 %v667
    %v707 = vunpack.c.l.b16 %v668
    %v708 = vunpack.c.l.b16 %v669
    %v709 = vunpack.c.l.b16 %v670
    %v710 = vunpack.c.l.b16 %v671
    %v711 = vunpack.c.l.b16 %v672
    %v712 = vunpack.c.l.b16 %v673
    %v713 = vunpack.c.l.b16 %v674
    %v714 = vunpack.c.l.b16 %v675
    %v715 = vunpack.c.l.b16 %v676
    %v716 = vunpack.c.l.b16 %v677
    %v717 = vunpack.c.l.b16 %v678
    %v718 = vunpack.c.l.b16 %v679
    %v719 = vpack.c.b16 %v704, %v703
    %v720 = vpack.c.b16 %v706, %v705
    %v721 = vpack.c.b16 %v708, %v707
    %v722 = vpack.c.b16 %v710, %v709
    %v723 = vpack.c.b16 %v712, %v711
    %v724 = vpack.c.b16 %v714, %v713
    %v725 = vpack.c.b16 %v716, %v715
    %v726 = vpack.c.b16 %v718, %v717
    %735 = vmatprep.subr.bf16.mxu0 0
    %736 = vmatpush1.bf16.msra.mxu0 %v726
    %737 = vmatprep.subr.bf16.mxu0 0
    %738 = vmatpush1.bf16.msra.mxu0 %v725
    %739 = vmatprep.subr.bf16.mxu0 0
    %740 = vmatpush1.bf16.msra.mxu0 %v724
    %741 = vmatprep.subr.bf16.mxu0 0
    %742 = vmatpush1.bf16.msra.mxu0 %v723
    %743 = vmatprep.subr.bf16.mxu0 0
    %744 = vmatpush1.bf16.msra.mxu0 %v722
    %745 = vmatprep.subr.bf16.mxu0 0
    %746 = vmatpush1.bf16.msra.mxu0 %v721
    %747 = vmatprep.subr.bf16.mxu0 0
    %748 = vmatpush1.bf16.msra.mxu0 %v720
    %749 = vmatprep.subr.bf16.mxu0 0
    %750 = vmatpush1.bf16.msra.mxu0 %v719
    %751 = vmatprep.subr.bf16.mxu0 0
    %752 = vmatpush2.bf16.msra.mxu0 0
    %753 = vmatprep.subr.bf16.mxu0 0
    %754 = vmatpush2.bf16.msra.mxu0 0
    %755 = vmatprep.subr.bf16.mxu0 0
    %756 = vmatpush2.bf16.msra.mxu0 0
    %757 = vmatprep.subr.bf16.mxu0 0
    %758 = vmatpush2.bf16.msra.mxu0 0
    %759 = vmatprep.subr.bf16.mxu0 0
    %760 = vmatpush2.bf16.msra.mxu0 0
    %761 = vmatprep.subr.bf16.mxu0 0
    %762 = vmatpush2.bf16.msra.mxu0 0
    %763 = vmatprep.subr.bf16.mxu0 0
    %764 = vmatpush2.bf16.msra.mxu0 0
    %765 = vmatprep.subr.bf16.mxu0 0
    %766 = vmatpush2.bf16.msra.mxu0 0
    %767 = vmatprep.mubr.bf16.mxu0 0
    %768 = vmatmul.mubr.bf16.gmra.mxu0 %v663
    %v769 = vpop.f32.mrf.mxu0
    %v770 = vadd.f32 %v685, %v769
    %v771 = vpop.f32.mrf.mxu0
    %v772 = vpop.f32.mrf.mxu0
    %v773 = vpop.f32.mrf.mxu0
    %774 = vdwg.mxu0
    %v775 = vxor.u32 %v770, 2147483648
    %v776 = vmul.f32 %v775, 1.442695
    %v777 = vpow.pop %v776
    %v778 = vadd.f32 %v777, 1.0
    %v779 = vrcp.pop %v778
    %v780 = vmul.f32 1.0, %v779
    %781 = vst [vmem:[#allocation11] sm:$0xff] %v780
    // Predicated region
    $region42: #{tpu_custom_call.1} parent=1 // pred_check
      _
    $region43: #{tpu_custom_call.1} parent=1 // pred_check_branch
      %783 = sbr.rel (0) target = $region45
    $region44: #{tpu_custom_call.1} parent=1 // pred_region
      %s785 = ssub.s32 128, 128
      %786 = vsyncadd [#allocation5], %s785
      %s788 = sshll.u32 [#allocation11], 4
      %s789 = int_to_ptr.vmem [resolvable:$true] %s788
      %791 = dma.vmem_to_hbm [thread:$0]  %s789, 128, %s6, [#allocation5]
    $region45: #{tpu_custom_call.1} parent=1 // pred_fallthru
      _
    // Predicated region
    $region46: #{tpu_custom_call.1} parent=1 // pred_check
      _
    $region47: #{tpu_custom_call.1} parent=1 // pred_check_branch
      %793 = sbr.rel (0) target = $region49
    $region48: #{tpu_custom_call.1} parent=1 // pred_region
      %794 = dma.done [#allocation5], 128
    $region49: #{tpu_custom_call.1} parent=1 // pred_fallthru
      _
    %795 = vsyncpa [#allocation4], 1
    %796 = vsyncpa [#allocation7], 1
    %797 = vsyncpa [#allocation10], 1
    %798 = vsyncpa [#allocation5], 1

</llo_original>
